<compile_context>
chip_gen: v7x
topology: tpu7x:2x2x1
jax: 0.10.0
libtpu: 0.0.40
codegen_flags: <defaults>
</compile_context>

<pallas_src>
import jax
import jax.numpy as jnp
from jax.experimental import pallas as pl
from jax.experimental.pallas import tpu as pltpu


def _round_up(v, m):
    return (v + m - 1) // m * m


def _nigru_kernel(x_ref, wr_ref, wz_ref, ut_ref, br_ref, bz_ref, bu_ref, o_ref):
    x = x_ref[...]                          # (tb, dp) f32
    xb = x.astype(jnp.bfloat16)             # bf16 operand for the MXU

    r = jax.nn.sigmoid(
        jnp.dot(xb, wr_ref[...], preferred_element_type=jnp.float32) + br_ref[...]
    )
    z = jax.nn.sigmoid(
        jnp.dot(xb, wz_ref[...], preferred_element_type=jnp.float32) + bz_ref[...]
    )

    inp2 = (x * r).astype(jnp.bfloat16)
    u = jnp.tanh(
        jnp.dot(inp2, ut_ref[...], preferred_element_type=jnp.float32) + bu_ref[...]
    )

    o_ref[...] = (z * x + (1.0 - z) * u).astype(o_ref.dtype)


def prepare_nigru_params(dropout_mask, W, b_W, U, b_U, dp):
    """Fold dropout mask into pre-transposed weights, split the r/z halves,
    zero-pad the feature dim to `dp`, cast weights to bf16.

    Call this ONCE (e.g. outside a per-timestep scan); it is pure wrapper-side
    preprocessing and should not be re-executed every step."""
    dim = dropout_mask.shape[0]
    mask = dropout_mask.astype(jnp.float32)
    wt = mask[:, None] * W.T.astype(jnp.float32)     # (dim, 2*dim), mask folded
    ut = mask[:, None] * U.T.astype(jnp.float32)     # (dim, dim),  mask folded
    pad = dp - dim
    wr = jnp.pad(wt[:, :dim], ((0, pad), (0, pad))).astype(jnp.bfloat16)
    wz = jnp.pad(wt[:, dim:], ((0, pad), (0, pad))).astype(jnp.bfloat16)
    utp = jnp.pad(ut, ((0, pad), (0, pad))).astype(jnp.bfloat16)
    br = jnp.pad(b_W[:dim].astype(jnp.float32), (0, pad)).reshape(1, dp)
    bz = jnp.pad(b_W[dim:].astype(jnp.float32), (0, pad)).reshape(1, dp)
    bu = jnp.pad(b_U.astype(jnp.float32), (0, pad)).reshape(1, dp)
    return wr, wz, utp, br, bz, bu


def nigru_cell_forward(x, dropout_mask, W, b_W, U, b_U, *, tb=128):
    """x: [B, dim] f32.  W: [2*dim, dim], b_W: [2*dim], U: [dim, dim], b_U: [dim].

    tb: batch tile (MXU row fill).  128 is a good default on v5e; 256 can help
    on v6e/v7x when B is large enough that the grid still has >= 2 steps
    (needed to feed both v7x TensorCores via the 'parallel' batch axis)."""
    B, dim = x.shape
    dp = _round_up(dim, 128)                      # lane-aligned feature dim
    tb = _round_up(min(tb, _round_up(B, 8)), 8)   # don't exceed (rounded) batch
    Bp = _round_up(B, tb)

    params = prepare_nigru_params(dropout_mask, W, b_W, U, b_U, dp)
    xp = jnp.pad(x.astype(jnp.float32), ((0, Bp - B), (0, dp - dim)))

    # VMEM budget: 3 bf16 weight matrices (double-buffered) + double-buffered
    # x/out tiles + f32 intermediates, plus headroom.
    need = 12 * dp * dp + 16 * tb * dp * 4 + (1 << 21)
    vmem_limit = int(min(max(need, 32 * 1024 * 1024), 128 * 1024 * 1024))
    # TODO(synk): for dim >~ 2048 on v7x (64 MiB VMEM/TC), add a second grid
    # axis that column-tiles Wr^T / Wz^T / U^T instead of keeping the full
    # weight matrices resident (and single-buffer them via pl.Buffered(1)).

    const = lambda i: (0, 0)

    out = pl.pallas_call(
        _nigru_kernel,
        out_shape=jax.ShapeDtypeStruct((Bp, dp), x.dtype),
        grid_spec=pltpu.PrefetchScalarGridSpec(
            num_scalar_prefetch=0,
            grid=(Bp // tb,),
            in_specs=[
                pl.BlockSpec((tb, dp), lambda i: (i, 0)),   # x tile
                pl.BlockSpec((dp, dp), const),              # Wr^T (mask folded, bf16)
                pl.BlockSpec((dp, dp), const),              # Wz^T (mask folded, bf16)
                pl.BlockSpec((dp, dp), const),              # U^T  (mask folded, bf16)
                pl.BlockSpec((1, dp), const),               # b_r
                pl.BlockSpec((1, dp), const),               # b_z
                pl.BlockSpec((1, dp), const),               # b_U
            ],
            out_specs=pl.BlockSpec((tb, dp), lambda i: (i, 0)),
        ),
        compiler_params=pltpu.CompilerParams(
            dimension_semantics=("parallel",),
            vmem_limit_bytes=vmem_limit,
        ),
    )(xp, *params)

    return out[:B, :dim]


def nigru_cell_reference(x, dropout_mask, W, b_W, U, b_U):
    inp = x * dropout_mask[None, :]
    gates = inp @ W.T + b_W
    dim = x.shape[1]
    r = jax.nn.sigmoid(gates[:, :dim])
    z = jax.nn.sigmoid(gates[:, dim:])
    inp2 = (x * r) * dropout_mask[None, :]
    u = jnp.tanh(inp2 @ U.T + b_U)
    return z * x + (1.0 - z) * u


def _make_inputs(key, B, dim):
    kx, kw, kbw, ku, kbu = jax.random.split(key, 5)
    bound = 1.0 / jnp.sqrt(jnp.float32(dim))   # nn.Linear-style init
    x = jax.random.normal(kx, (B, dim), dtype=jnp.float32)
    W = jax.random.uniform(kw, (2 * dim, dim), jnp.float32, -bound, bound)
    b_W = jax.random.uniform(kbw, (2 * dim,), jnp.float32, -bound, bound)
    U = jax.random.uniform(ku, (dim, dim), jnp.float32, -bound, bound)
    b_U = jax.random.uniform(kbu, (dim,), jnp.float32, -bound, bound)
    # dropout_rec=0.0 default -> dropout_mask buffer stays all-ones.
    dropout_mask = jnp.ones((dim,), dtype=jnp.float32)
    return x, dropout_mask, W, b_W, U, b_U


if __name__ == "__main__":
    key = jax.random.PRNGKey(0)
    k1, k2 = jax.random.split(key)

    # Tolerance loosened slightly vs. pure f32 because weights run in bf16.
    ATOL = RTOL = 2e-2

    # Case 1: small shapes matching the module defaults (B=16, dim=32).
    x, m, W, bW, U, bU = _make_inputs(k1, 16, 32)
    out = jax.block_until_ready(nigru_cell_forward(x, m, W, bW, U, bU))
    ref = nigru_cell_reference(x, m, W, bW, U, bU)
    assert out.shape == (16, 32)
    assert jnp.allclose(out, ref, atol=ATOL, rtol=RTOL)

    # Case 2: ragged batch / non-multiple dim exercising padding and grid > 1.
    x, m, W, bW, U, bU = _make_inputs(k2, 272, 96)
    out = jax.block_until_ready(nigru_cell_forward(x, m, W, bW, U, bU, tb=128))
    ref = nigru_cell_reference(x, m, W, bW, U, bU)
    assert out.shape == (272, 96)
    assert jnp.allclose(out, ref, atol=ATOL, rtol=RTOL)

    print("KERNEL_OK")
</pallas_src>

<mosaic_0001>
module attributes {stable_mosaic.version = 11 : i64} {
  func.func @_nigru_kernel(%arg0: i32, %arg1: memref<16x128xf32, #tpu.memory_space<vmem>>, %arg2: memref<128x128xbf16, #tpu.memory_space<vmem>>, %arg3: memref<128x128xbf16, #tpu.memory_space<vmem>>, %arg4: memref<128x128xbf16, #tpu.memory_space<vmem>>, %arg5: memref<1x128xf32, #tpu.memory_space<vmem>>, %arg6: memref<1x128xf32, #tpu.memory_space<vmem>>, %arg7: memref<1x128xf32, #tpu.memory_space<vmem>>, %arg8: memref<16x128xf32, #tpu.memory_space<vmem>>) attributes {dimension_semantics = [#tpu.dimension_semantics<parallel>], iteration_bounds = array<i64: 1>, scalar_prefetch = 0 : i64, scratch_operands = 0 : i64, tpu.core_type = #tpu.core_type<tc>, window_params = [{transform_indices = @transform_0, window_bounds = array<i64: 16, 128>}, {pipeline_mode = #tpu.pipeline_mode<synchronous>, transform_indices = @transform_1, window_bounds = array<i64: 128, 128>}, {pipeline_mode = #tpu.pipeline_mode<synchronous>, transform_indices = @transform_2, window_bounds = array<i64: 128, 128>}, {pipeline_mode = #tpu.pipeline_mode<synchronous>, transform_indices = @transform_3, window_bounds = array<i64: 128, 128>}, {pipeline_mode = #tpu.pipeline_mode<synchronous>, transform_indices = @transform_4, window_bounds = array<i64: 1, 128>}, {pipeline_mode = #tpu.pipeline_mode<synchronous>, transform_indices = @transform_5, window_bounds = array<i64: 1, 128>}, {pipeline_mode = #tpu.pipeline_mode<synchronous>, transform_indices = @transform_6, window_bounds = array<i64: 1, 128>}, {transform_indices = @transform_7, window_bounds = array<i64: 16, 128>}]} {
    %c0 = arith.constant 0 : index
    %c0_0 = arith.constant 0 : index
    %0 = vector.load %arg1[%c0, %c0_0] : memref<16x128xf32, #tpu.memory_space<vmem>>, vector<16x128xf32>
    %1 = arith.truncf %0 : vector<16x128xf32> to vector<16x128xbf16>
    %c0_1 = arith.constant 0 : index
    %c0_2 = arith.constant 0 : index
    %2 = vector.load %arg2[%c0_1, %c0_2] : memref<128x128xbf16, #tpu.memory_space<vmem>>, vector<128x128xbf16>
    %cst = arith.constant dense<0.000000e+00> : vector<16x128xf32>
    %3 = tpu.matmul %1, %2, %cst {dimension_numbers = #tpu.dot_dimension_numbers<[1], [0], [0], [1], [0, 0, 1, 1], [], []>} : vector<16x128xbf16>, vector<128x128xbf16>, vector<16x128xf32> -> vector<16x128xf32>
    %c0_3 = arith.constant 0 : index
    %c0_4 = arith.constant 0 : index
    %4 = vector.load %arg5[%c0_3, %c0_4] : memref<1x128xf32, #tpu.memory_space<vmem>>, vector<1x128xf32>
    %5 = vector.broadcast %4 : vector<1x128xf32> to vector<16x128xf32>
    %6 = arith.addf %3, %5 : vector<16x128xf32>
    %7 = arith.negf %6 : vector<16x128xf32>
    %8 = math.exp %7 : vector<16x128xf32>
    %cst_5 = arith.constant 1.000000e+00 : f32
    %9 = vector.broadcast %cst_5 : f32 to vector<16x128xf32>
    %10 = arith.addf %9, %8 : vector<16x128xf32>
    %11 = arith.divf %9, %10 : vector<16x128xf32>
    %c0_6 = arith.constant 0 : index
    %c0_7 = arith.constant 0 : index
    %12 = vector.load %arg3[%c0_6, %c0_7] : memref<128x128xbf16, #tpu.memory_space<vmem>>, vector<128x128xbf16>
    %cst_8 = arith.constant dense<0.000000e+00> : vector<16x128xf32>
    %13 = tpu.matmul %1, %12, %cst_8 {dimension_numbers = #tpu.dot_dimension_numbers<[1], [0], [0], [1], [0, 0, 1, 1], [], []>} : vector<16x128xbf16>, vector<128x128xbf16>, vector<16x128xf32> -> vector<16x128xf32>
    %c0_9 = arith.constant 0 : index
    %c0_10 = arith.constant 0 : index
    %14 = vector.load %arg6[%c0_9, %c0_10] : memref<1x128xf32, #tpu.memory_space<vmem>>, vector<1x128xf32>
    %15 = vector.broadcast %14 : vector<1x128xf32> to vector<16x128xf32>
    %16 = arith.addf %13, %15 : vector<16x128xf32>
    %17 = arith.negf %16 : vector<16x128xf32>
    %18 = math.exp %17 : vector<16x128xf32>
    %cst_11 = arith.constant 1.000000e+00 : f32
    %19 = vector.broadcast %cst_11 : f32 to vector<16x128xf32>
    %20 = arith.addf %19, %18 : vector<16x128xf32>
    %21 = arith.divf %19, %20 : vector<16x128xf32>
    %22 = arith.mulf %0, %11 : vector<16x128xf32>
    %23 = arith.truncf %22 : vector<16x128xf32> to vector<16x128xbf16>
    %c0_12 = arith.constant 0 : index
    %c0_13 = arith.constant 0 : index
    %24 = vector.load %arg4[%c0_12, %c0_13] : memref<128x128xbf16, #tpu.memory_space<vmem>>, vector<128x128xbf16>
    %cst_14 = arith.constant dense<0.000000e+00> : vector<16x128xf32>
    %25 = tpu.matmul %23, %24, %cst_14 {dimension_numbers = #tpu.dot_dimension_numbers<[1], [0], [0], [1], [0, 0, 1, 1], [], []>} : vector<16x128xbf16>, vector<128x128xbf16>, vector<16x128xf32> -> vector<16x128xf32>
    %c0_15 = arith.constant 0 : index
    %c0_16 = arith.constant 0 : index
    %26 = vector.load %arg7[%c0_15, %c0_16] : memref<1x128xf32, #tpu.memory_space<vmem>>, vector<1x128xf32>
    %27 = vector.broadcast %26 : vector<1x128xf32> to vector<16x128xf32>
    %28 = arith.addf %25, %27 : vector<16x128xf32>
    %29 = math.tanh %28 : vector<16x128xf32>
    %30 = arith.mulf %21, %0 : vector<16x128xf32>
    %cst_17 = arith.constant 1.000000e+00 : f32
    %31 = vector.broadcast %cst_17 : f32 to vector<16x128xf32>
    %32 = arith.subf %31, %21 : vector<16x128xf32>
    %33 = arith.mulf %32, %29 : vector<16x128xf32>
    %34 = arith.addf %30, %33 : vector<16x128xf32>
    %c0_18 = arith.constant 0 : index
    %c0_19 = arith.constant 0 : index
    %35 = vector.load %arg8[%c0_18, %c0_19] : memref<16x128xf32, #tpu.memory_space<vmem>>, vector<16x128xf32>
    tpu.vector_store %arg8[%c0_18, %c0_19], %34 {strides = array<i32>} : memref<16x128xf32, #tpu.memory_space<vmem>>, vector<16x128xf32>,
    return
  }
  func.func @transform_0(%arg0: i32) -> (i32, i32) {
    %c0_i32 = arith.constant 0 : i32
    %c0_i32_0 = arith.constant 0 : i32
    return %arg0, %c0_i32 : i32, i32
  }
  func.func @transform_1(%arg0: i32) -> (i32, i32) {
    %c0_i32 = arith.constant 0 : i32
    %c0_i32_0 = arith.constant 0 : i32
    %c0_i32_1 = arith.constant 0 : i32
    return %c0_i32, %c0_i32_0 : i32, i32
  }
  func.func @transform_2(%arg0: i32) -> (i32, i32) {
    %c0_i32 = arith.constant 0 : i32
    %c0_i32_0 = arith.constant 0 : i32
    %c0_i32_1 = arith.constant 0 : i32
    return %c0_i32, %c0_i32_0 : i32, i32
  }
  func.func @transform_3(%arg0: i32) -> (i32, i32) {
    %c0_i32 = arith.constant 0 : i32
    %c0_i32_0 = arith.constant 0 : i32
    %c0_i32_1 = arith.constant 0 : i32
    return %c0_i32, %c0_i32_0 : i32, i32
  }
  func.func @transform_4(%arg0: i32) -> (i32, i32) {
    %c0_i32 = arith.constant 0 : i32
    %c0_i32_0 = arith.constant 0 : i32
    %c0_i32_1 = arith.constant 0 : i32
    return %c0_i32, %c0_i32_0 : i32, i32
  }
  func.func @transform_5(%arg0: i32) -> (i32, i32) {
    %c0_i32 = arith.constant 0 : i32
    %c0_i32_0 = arith.constant 0 : i32
    %c0_i32_1 = arith.constant 0 : i32
    return %c0_i32, %c0_i32_0 : i32, i32
  }
  func.func @transform_6(%arg0: i32) -> (i32, i32) {
    %c0_i32 = arith.constant 0 : i32
    %c0_i32_0 = arith.constant 0 : i32
    %c0_i32_1 = arith.constant 0 : i32
    return %c0_i32, %c0_i32_0 : i32, i32
  }
  func.func @transform_7(%arg0: i32) -> (i32, i32) {
    %c0_i32 = arith.constant 0 : i32
    %c0_i32_0 = arith.constant 0 : i32
    return %arg0, %c0_i32 : i32, i32
  }
}

</mosaic_0001>

<llo_original>
// kernel: tpu_custom_call.1
$region0: #{tpu_custom_call.1}
  #allocation0 [shape = 'u32[]', space=smem, size = 0x4, offset = 0x4, fixed_abs, tag = 'smem constant byte address 0x4 - core index']
  #allocation1 [shape = 'u32[144,128]{1,0:T(1,128)}', space=vmem, size = 0x12000, scoped, tag = 'internal scratch']
  %s0 = inlined_call_operand.hbm [shape: f32[16,128], index: 0, kind: input, shape index: {}]
  %s1 = inlined_call_operand.hbm [shape: bf16[128,128], index: 1, kind: input, shape index: {}]
  %s2 = inlined_call_operand.hbm [shape: bf16[128,128], index: 2, kind: input, shape index: {}]
  %s3 = inlined_call_operand.hbm [shape: bf16[128,128], index: 3, kind: input, shape index: {}]
  %s4 = inlined_call_operand.vmem [shape: f32[1,128], index: 4, kind: input, shape index: {}]
  %s5 = inlined_call_operand.vmem [shape: f32[1,128], index: 5, kind: input, shape index: {}]
  %s6 = inlined_call_operand.vmem [shape: f32[1,128], index: 6, kind: input, shape index: {}]
  %s7 = inlined_call_operand.hbm [shape: f32[16,128], index: 7, kind: output, shape index: {}]
  %s8 = sld [smem:[#allocation0]]
  $region54: #{tpu_custom_call.1} parent=0
    _
  %s10 = ssub.s32 1, %s8
  %s11 = scalar_select 0, %s10, %s8
  $region1: #{tpu_custom_call.1} parent=0
    #allocation2 [shape = 'u8[8192]{0}', space=vmem, size = 0x2000, scoped, tag = 'input window, operand 0, single buffered']
    #allocation3 [shape = 's32[1]{0}', space=sflag, size = 0x4, scoped, tag = 'scoped memory for tpu_custom_call.1']
    #allocation4 [shape = 's32[1]{0}', space=sflag, size = 0x4, scoped, tag = 'scoped memory for tpu_custom_call.1']
    #allocation5 [shape = 'u8[32768]{0}', space=vmem, size = 0x8000, scoped, tag = 'input window, operand 1, single buffered']
    #allocation6 [shape = 's32[1]{0}', space=sflag, size = 0x4, scoped, tag = 'scoped memory for tpu_custom_call.1']
    #allocation7 [shape = 'u8[32768]{0}', space=vmem, size = 0x8000, scoped, tag = 'input window, operand 2, single buffered']
    #allocation8 [shape = 'u8[32768]{0}', space=vmem, size = 0x8000, scoped, tag = 'input window, operand 3, single buffered']
    #allocation9 [shape = 's32[1]{0}', space=sflag, size = 0x4, scoped, tag = 'scoped memory for tpu_custom_call.1']
    #allocation10 [shape = 'u8[8192]{0}', space=vmem, size = 0x2000, scoped, tag = 'output window, operand 0, single buffered']
    %12 = vsyncpa [#allocation3], 0
    %13 = vsyncpa [#allocation6], 0
    %14 = vsyncpa [#allocation9], 0
    %15 = vsyncpa [#allocation4], 0
    // Predicated region
    $region2: #{tpu_custom_call.1} parent=1 // pred_check
      _
    $region3: #{tpu_custom_call.1} parent=1 // pred_check_branch
      %17 = sbr.rel (0) target = $region5
    $region4: #{tpu_custom_call.1} parent=1 // pred_region
      %s19 = ssub.s32 256, 256
      %20 = vsyncadd [#allocation3], %s19
      %s21 = sshll.u32 [#allocation2], 4
      %s22 = int_to_ptr.vmem [resolvable:$true] %s21
      %27 = dma.hbm_to_vmem [thread:$0]  %s0, 256, %s22, [#allocation3], 128, 128, 8
    $region5: #{tpu_custom_call.1} parent=1 // pred_fallthru
      _
    // Predicated region
    $region6: #{tpu_custom_call.1} parent=1 // pred_check
      _
    $region7: #{tpu_custom_call.1} parent=1 // pred_check_branch
      %29 = sbr.rel (0) target = $region9
    $region8: #{tpu_custom_call.1} parent=1 // pred_region
      %s31 = ssub.s32 1024, 1024
      %32 = vsyncadd [#allocation6], %s31
      %s33 = sshll.u32 [#allocation5], 4
      %s34 = int_to_ptr.vmem [resolvable:$true] %s33
      %39 = dma.hbm_to_vmem [thread:$0]  %s1, 1024, %s34, [#allocation6], 64, 64, 4
    $region9: #{tpu_custom_call.1} parent=1 // pred_fallthru
      _
    // Predicated region
    $region10: #{tpu_custom_call.1} parent=1 // pred_check
      _
    $region11: #{tpu_custom_call.1} parent=1 // pred_check_branch
      %41 = sbr.rel (0) target = $region13
    $region12: #{tpu_custom_call.1} parent=1 // pred_region
      %s43 = ssub.s32 1024, 1024
      %44 = vsyncadd [#allocation6], %s43
      %s45 = sshll.u32 [#allocation7], 4
      %s46 = int_to_ptr.vmem [resolvable:$true] %s45
      %51 = dma.hbm_to_vmem [thread:$0]  %s2, 1024, %s46, [#allocation6], 64, 64, 4
    $region13: #{tpu_custom_call.1} parent=1 // pred_fallthru
      _
    // Predicated region
    $region14: #{tpu_custom_call.1} parent=1 // pred_check
      _
    $region15: #{tpu_custom_call.1} parent=1 // pred_check_branch
      %53 = sbr.rel (0) target = $region17
    $region16: #{tpu_custom_call.1} parent=1 // pred_region
      %s55 = ssub.s32 1024, 1024
      %56 = vsyncadd [#allocation9], %s55
      %s57 = sshll.u32 [#allocation8], 4
      %s58 = int_to_ptr.vmem [resolvable:$true] %s57
      %63 = dma.hbm_to_vmem [thread:$0]  %s3, 1024, %s58, [#allocation9], 64, 64, 4
    $region17: #{tpu_custom_call.1} parent=1 // pred_fallthru
      _
    // Predicated region
    $region18: #{tpu_custom_call.1} parent=1 // pred_check
      _
    $region19: #{tpu_custom_call.1} parent=1 // pred_check_branch
      %65 = sbr.rel (0) target = $region21
    $region20: #{tpu_custom_call.1} parent=1 // pred_region
      _
    $region21: #{tpu_custom_call.1} parent=1 // pred_fallthru
      _
    // Predicated region
    $region22: #{tpu_custom_call.1} parent=1 // pred_check
      _
    $region23: #{tpu_custom_call.1} parent=1 // pred_check_branch
      %67 = sbr.rel (0) target = $region25
    $region24: #{tpu_custom_call.1} parent=1 // pred_region
      _
    $region25: #{tpu_custom_call.1} parent=1 // pred_fallthru
      _
    // Predicated region
    $region26: #{tpu_custom_call.1} parent=1 // pred_check
      _
    $region27: #{tpu_custom_call.1} parent=1 // pred_check_branch
      %69 = sbr.rel (0) target = $region29
    $region28: #{tpu_custom_call.1} parent=1 // pred_region
      _
    $region29: #{tpu_custom_call.1} parent=1 // pred_fallthru
      _
    // Predicated region
    $region30: #{tpu_custom_call.1} parent=1 // pred_check
      _
    $region31: #{tpu_custom_call.1} parent=1 // pred_check_branch
      %71 = sbr.rel (0) target = $region33
    $region32: #{tpu_custom_call.1} parent=1 // pred_region
      %72 = dma.done [#allocation3], 256
    $region33: #{tpu_custom_call.1} parent=1 // pred_fallthru
      _
    // Predicated region
    $region34: #{tpu_custom_call.1} parent=1 // pred_check
      _
    $region35: #{tpu_custom_call.1} parent=1 // pred_check_branch
      %74 = sbr.rel (0) target = $region37
    $region36: #{tpu_custom_call.1} parent=1 // pred_region
      %75 = dma.done [#allocation6], 1024
    $region37: #{tpu_custom_call.1} parent=1 // pred_fallthru
      _
    // Predicated region
    $region38: #{tpu_custom_call.1} parent=1 // pred_check
      _
    $region39: #{tpu_custom_call.1} parent=1 // pred_check_branch
      %77 = sbr.rel (0) target = $region41
    $region40: #{tpu_custom_call.1} parent=1 // pred_region
      %78 = dma.done [#allocation6], 1024
    $region41: #{tpu_custom_call.1} parent=1 // pred_fallthru
      _
    // Predicated region
    $region42: #{tpu_custom_call.1} parent=1 // pred_check
      _
    $region43: #{tpu_custom_call.1} parent=1 // pred_check_branch
      %80 = sbr.rel (0) target = $region45
    $region44: #{tpu_custom_call.1} parent=1 // pred_region
      %81 = dma.done [#allocation9], 1024
    $region45: #{tpu_custom_call.1} parent=1 // pred_fallthru
      _
    %v83 = vld [vmem:[#allocation2] sm:$0xff]
    %v84 = vld [vmem:[#allocation2 + $0x8] sm:$0xff]
    %v85 = vpack.c.bf16 %v84, %v83
    %v86 = vld [vmem:[#allocation5] sm:$0xf]
    %v87 = vld [vmem:[#allocation5 + $0x4] sm:$0xf]
    %v88 = vld [vmem:[#allocation5 + $0x8] sm:$0xf]
    %v89 = vld [vmem:[#allocation5 + $0xc] sm:$0xf]
    %v90 = vld [vmem:[#allocation5 + $0x10] sm:$0xf]
    %v91 = vld [vmem:[#allocation5 + $0x14] sm:$0xf]
    %v92 = vld [vmem:[#allocation5 + $0x18] sm:$0xf]
    %v93 = vld [vmem:[#allocation5 + $0x1c] sm:$0xf]
    %v94 = vld [vmem:[#allocation5 + $0x20] sm:$0xf]
    %v95 = vld [vmem:[#allocation5 + $0x24] sm:$0xf]
    %v96 = vld [vmem:[#allocation5 + $0x28] sm:$0xf]
    %v97 = vld [vmem:[#allocation5 + $0x2c] sm:$0xf]
    %v98 = vld [vmem:[#allocation5 + $0x30] sm:$0xf]
    %v99 = vld [vmem:[#allocation5 + $0x34] sm:$0xf]
    %v100 = vld [vmem:[#allocation5 + $0x38] sm:$0xf]
    %v101 = vld [vmem:[#allocation5 + $0x3c] sm:$0xf]
    %v102 = vld [vmem:[%s4] sm:$0x1]
    %v104 = vlaneseq
    %v105 = vshrl.u32 %v104, 7
    %v106 = vsub.s32 0, %v105
    %v107 = vrot.slane %v102, %v106
    %v125 = vunpack.c.l.b16 %v86
    %v126 = vunpack.c.l.b16 %v87
    %v127 = vunpack.c.l.b16 %v88
    %v128 = vunpack.c.l.b16 %v89
    %v129 = vunpack.c.l.b16 %v90
    %v130 = vunpack.c.l.b16 %v91
    %v131 = vunpack.c.l.b16 %v92
    %v132 = vunpack.c.l.b16 %v93
    %v133 = vunpack.c.l.b16 %v94
    %v134 = vunpack.c.l.b16 %v95
    %v135 = vunpack.c.l.b16 %v96
    %v136 = vunpack.c.l.b16 %v97
    %v137 = vunpack.c.l.b16 %v98
    %v138 = vunpack.c.l.b16 %v99
    %v139 = vunpack.c.l.b16 %v100
    %v140 = vunpack.c.l.b16 %v101
    %v141 = vpack.c.b16 %v126, %v125
    %v142 = vpack.c.b16 %v128, %v127
    %v143 = vpack.c.b16 %v130, %v129
    %v144 = vpack.c.b16 %v132, %v131
    %v145 = vpack.c.b16 %v134, %v133
    %v146 = vpack.c.b16 %v136, %v135
    %v147 = vpack.c.b16 %v138, %v137
    %v148 = vpack.c.b16 %v140, %v139
    %157 = vmatprep.subr.bf16.mxu0 0
    %158 = vmatpush1.bf16.msra.mxu0 %v141
    %159 = vmatprep.subr.bf16.mxu0 0
    %160 = vmatpush1.bf16.msra.mxu0 %v142
    %161 = vmatprep.subr.bf16.mxu0 0
    %162 = vmatpush1.bf16.msra.mxu0 %v143
    %163 = vmatprep.subr.bf16.mxu0 0
    %164 = vmatpush1.bf16.msra.mxu0 %v144
    %165 = vmatprep.subr.bf16.mxu0 0
    %166 = vmatpush1.bf16.msra.mxu0 %v145
    %167 = vmatprep.subr.bf16.mxu0 0
    %168 = vmatpush1.bf16.msra.mxu0 %v146
    %169 = vmatprep.subr.bf16.mxu0 0
    %170 = vmatpush1.bf16.msra.mxu0 %v147
    %171 = vmatprep.subr.bf16.mxu0 0
    %172 = vmatpush1.bf16.msra.mxu0 %v148
    %173 = vmatprep.subr.bf16.mxu0 0
    %174 = vmatpush1.bf16.msra.mxu0 0
    %175 = vmatprep.subr.bf16.mxu0 0
    %176 = vmatpush1.bf16.msra.mxu0 0
    %177 = vmatprep.subr.bf16.mxu0 0
    %178 = vmatpush1.bf16.msra.mxu0 0
    %179 = vmatprep.subr.bf16.mxu0 0
    %180 = vmatpush1.bf16.msra.mxu0 0
    %181 = vmatprep.subr.bf16.mxu0 0
    %182 = vmatpush1.bf16.msra.mxu0 0
    %183 = vmatprep.subr.bf16.mxu0 0
    %184 = vmatpush1.bf16.msra.mxu0 0
    %185 = vmatprep.subr.bf16.mxu0 0
    %186 = vmatpush1.bf16.msra.mxu0 0
    %187 = vmatprep.subr.bf16.mxu0 0
    %188 = vmatpush1.bf16.msra.mxu0 0
    %189 = vmatprep.mubr.bf16.mxu0 0
    %190 = vmatmul.mubr.bf16.gmra.mrb[0].mxu0 %v85
    %v191 = vpop.f32.mrb[0].mxu0
    %v192 = vadd.f32 %v107, %v191
    %v193 = vpop.f32.mrb[0].mxu0
    %v194 = vpop.f32.mrb[0].mxu0
    %v195 = vadd.f32 %v107, %v194
    %v196 = vpop.f32.mrb[0].mxu0
    %197 = vdwg.mxu0
    %v198 = vxor.u32 %v192, 2147483648
    %v199 = vxor.u32 %v195, 2147483648
    %v200 = vmul.f32 %v198, 1.442695
    %v201 = vpow.pop %v200
    %v202 = vmul.f32 %v199, 1.442695
    %v203 = vpow.pop %v202
    %v204 = vadd.f32 %v201, 1.0
    %v205 = vadd.f32 %v203, 1.0
    %v206 = vrcp.pop %v204
    %v207 = vmul.f32 1.0, %v206
    %v208 = vrcp.pop %v205
    %v209 = vmul.f32 1.0, %v208
    %v210 = vld [vmem:[#allocation7] sm:$0xf]
    %v211 = vld [vmem:[#allocation7 + $0x4] sm:$0xf]
    %v212 = vld [vmem:[#allocation7 + $0x8] sm:$0xf]
    %v213 = vld [vmem:[#allocation7 + $0xc] sm:$0xf]
    %v214 = vld [vmem:[#allocation7 + $0x10] sm:$0xf]
    %v215 = vld [vmem:[#allocation7 + $0x14] sm:$0xf]
    %v216 = vld [vmem:[#allocation7 + $0x18] sm:$0xf]
    %v217 = vld [vmem:[#allocation7 + $0x1c] sm:$0xf]
    %v218 = vld [vmem:[#allocation7 + $0x20] sm:$0xf]
    %v219 = vld [vmem:[#allocation7 + $0x24] sm:$0xf]
    %v220 = vld [vmem:[#allocation7 + $0x28] sm:$0xf]
    %v221 = vld [vmem:[#allocation7 + $0x2c] sm:$0xf]
    %v222 = vld [vmem:[#allocation7 + $0x30] sm:$0xf]
    %v223 = vld [vmem:[#allocation7 + $0x34] sm:$0xf]
    %v224 = vld [vmem:[#allocation7 + $0x38] sm:$0xf]
    %v225 = vld [vmem:[#allocation7 + $0x3c] sm:$0xf]
    %v226 = vld [vmem:[%s5] sm:$0x1]
    %v228 = vlaneseq
    %v229 = vshrl.u32 %v228, 7
    %v230 = vsub.s32 0, %v229
    %v231 = vrot.slane %v226, %v230
    %v249 = vunpack.c.l.b16 %v210
    %v250 = vunpack.c.l.b16 %v211
    %v251 = vunpack.c.l.b16 %v212
    %v252 = vunpack.c.l.b16 %v213
    %v253 = vunpack.c.l.b16 %v214
    %v254 = vunpack.c.l.b16 %v215
    %v255 = vunpack.c.l.b16 %v216
    %v256 = vunpack.c.l.b16 %v217
    %v257 = vunpack.c.l.b16 %v218
    %v258 = vunpack.c.l.b16 %v219
    %v259 = vunpack.c.l.b16 %v220
    %v260 = vunpack.c.l.b16 %v221
    %v261 = vunpack.c.l.b16 %v222
    %v262 = vunpack.c.l.b16 %v223
    %v263 = vunpack.c.l.b16 %v224
    %v264 = vunpack.c.l.b16 %v225
    %v265 = vpack.c.b16 %v250, %v249
    %v266 = vpack.c.b16 %v252, %v251
    %v267 = vpack.c.b16 %v254, %v253
    %v268 = vpack.c.b16 %v256, %v255
    %v269 = vpack.c.b16 %v258, %v257
    %v270 = vpack.c.b16 %v260, %v259
    %v271 = vpack.c.b16 %v262, %v261
    %v272 = vpack.c.b16 %v264, %v263
    %281 = vmatprep.subr.bf16.mxu0 0
    %282 = vmatpush1.bf16.msra.mxu0 %v265
    %283 = vmatprep.subr.bf16.mxu0 0
    %284 = vmatpush1.bf16.msra.mxu0 %v266
    %285 = vmatprep.subr.bf16.mxu0 0
    %286 = vmatpush1.bf16.msra.mxu0 %v267
    %287 = vmatprep.subr.bf16.mxu0 0
    %288 = vmatpush1.bf16.msra.mxu0 %v268
    %289 = vmatprep.subr.bf16.mxu0 0
    %290 = vmatpush1.bf16.msra.mxu0 %v269
    %291 = vmatprep.subr.bf16.mxu0 0
    %292 = vmatpush1.bf16.msra.mxu0 %v270
    %293 = vmatprep.subr.bf16.mxu0 0
    %294 = vmatpush1.bf16.msra.mxu0 %v271
    %295 = vmatprep.subr.bf16.mxu0 0
    %296 = vmatpush1.bf16.msra.mxu0 %v272
    %297 = vmatprep.subr.bf16.mxu0 0
    %298 = vmatpush1.bf16.msra.mxu0 0
    %299 = vmatprep.subr.bf16.mxu0 0
    %300 = vmatpush1.bf16.msra.mxu0 0
    %301 = vmatprep.subr.bf16.mxu0 0
    %302 = vmatpush1.bf16.msra.mxu0 0
    %303 = vmatprep.subr.bf16.mxu0 0
    %304 = vmatpush1.bf16.msra.mxu0 0
    %305 = vmatprep.subr.bf16.mxu0 0
    %306 = vmatpush1.bf16.msra.mxu0 0
    %307 = vmatprep.subr.bf16.mxu0 0
    %308 = vmatpush1.bf16.msra.mxu0 0
    %309 = vmatprep.subr.bf16.mxu0 0
    %310 = vmatpush1.bf16.msra.mxu0 0
    %311 = vmatprep.subr.bf16.mxu0 0
    %312 = vmatpush1.bf16.msra.mxu0 0
    %313 = vmatprep.mubr.bf16.mxu0 0
    %314 = vmatmul.mubr.bf16.gmra.mrb[0].mxu0 %v85
    %v315 = vpop.f32.mrb[0].mxu0
    %v316 = vadd.f32 %v231, %v315
    %v317 = vpop.f32.mrb[0].mxu0
    %v318 = vpop.f32.mrb[0].mxu0
    %v319 = vadd.f32 %v231, %v318
    %v320 = vpop.f32.mrb[0].mxu0
    %321 = vdwg.mxu0
    %v322 = vxor.u32 %v316, 2147483648
    %v323 = vxor.u32 %v319, 2147483648
    %v324 = vmul.f32 %v322, 1.442695
    %v325 = vpow.pop %v324
    %v326 = vmul.f32 %v323, 1.442695
    %v327 = vpow.pop %v326
    %v328 = vadd.f32 %v325, 1.0
    %v329 = vadd.f32 %v327, 1.0
    %v330 = vrcp.pop %v328
    %v331 = vmul.f32 1.0, %v330
    %v332 = vrcp.pop %v329
    %v333 = vmul.f32 1.0, %v332
    %v334 = vmul.f32 %v83, %v207
    %v335 = vmul.f32 %v84, %v209
    %v336 = vpack.c.bf16 %v335, %v334
    %v337 = vld [vmem:[#allocation8] sm:$0xf]
    %v338 = vld [vmem:[#allocation8 + $0x4] sm:$0xf]
    %v339 = vld [vmem:[#allocation8 + $0x8] sm:$0xf]
    %v340 = vld [vmem:[#allocation8 + $0xc] sm:$0xf]
    %v341 = vld [vmem:[#allocation8 + $0x10] sm:$0xf]
    %v342 = vld [vmem:[#allocation8 + $0x14] sm:$0xf]
    %v343 = vld [vmem:[#allocation8 + $0x18] sm:$0xf]
    %v344 = vld [vmem:[#allocation8 + $0x1c] sm:$0xf]
    %v345 = vld [vmem:[#allocation8 + $0x20] sm:$0xf]
    %v346 = vld [vmem:[#allocation8 + $0x24] sm:$0xf]
    %v347 = vld [vmem:[#allocation8 + $0x28] sm:$0xf]
    %v348 = vld [vmem:[#allocation8 + $0x2c] sm:$0xf]
    %v349 = vld [vmem:[#allocation8 + $0x30] sm:$0xf]
    %v350 = vld [vmem:[#allocation8 + $0x34] sm:$0xf]
    %v351 = vld [vmem:[#allocation8 + $0x38] sm:$0xf]
    %v352 = vld [vmem:[#allocation8 + $0x3c] sm:$0xf]
    %v353 = vld [vmem:[%s6] sm:$0x1]
    %v355 = vlaneseq
    %v356 = vshrl.u32 %v355, 7
    %v357 = vsub.s32 0, %v356
    %v358 = vrot.slane %v353, %v357
    %v376 = vunpack.c.l.b16 %v337
    %v377 = vunpack.c.l.b16 %v338
    %v378 = vunpack.c.l.b16 %v339
    %v379 = vunpack.c.l.b16 %v340
    %v380 = vunpack.c.l.b16 %v341
    %v381 = vunpack.c.l.b16 %v342
    %v382 = vunpack.c.l.b16 %v343
    %v383 = vunpack.c.l.b16 %v344
    %v384 = vunpack.c.l.b16 %v345
    %v385 = vunpack.c.l.b16 %v346
    %v386 = vunpack.c.l.b16 %v347
    %v387 = vunpack.c.l.b16 %v348
    %v388 = vunpack.c.l.b16 %v349
    %v389 = vunpack.c.l.b16 %v350
    %v390 = vunpack.c.l.b16 %v351
    %v391 = vunpack.c.l.b16 %v352
    %v392 = vpack.c.b16 %v377, %v376
    %v393 = vpack.c.b16 %v379, %v378
    %v394 = vpack.c.b16 %v381, %v380
    %v395 = vpack.c.b16 %v383, %v382
    %v396 = vpack.c.b16 %v385, %v384
    %v397 = vpack.c.b16 %v387, %v386
    %v398 = vpack.c.b16 %v389, %v388
    %v399 = vpack.c.b16 %v391, %v390
    %408 = vmatprep.subr.bf16.mxu0 0
    %409 = vmatpush1.bf16.msra.mxu0 %v392
    %410 = vmatprep.subr.bf16.mxu0 0
    %411 = vmatpush1.bf16.msra.mxu0 %v393
    %412 = vmatprep.subr.bf16.mxu0 0
    %413 = vmatpush1.bf16.msra.mxu0 %v394
    %414 = vmatprep.subr.bf16.mxu0 0
    %415 = vmatpush1.bf16.msra.mxu0 %v395
    %416 = vmatprep.subr.bf16.mxu0 0
    %417 = vmatpush1.bf16.msra.mxu0 %v396
    %418 = vmatprep.subr.bf16.mxu0 0
    %419 = vmatpush1.bf16.msra.mxu0 %v397
    %420 = vmatprep.subr.bf16.mxu0 0
    %421 = vmatpush1.bf16.msra.mxu0 %v398
    %422 = vmatprep.subr.bf16.mxu0 0
    %423 = vmatpush1.bf16.msra.mxu0 %v399
    %424 = vmatprep.subr.bf16.mxu0 0
    %425 = vmatpush1.bf16.msra.mxu0 0
    %426 = vmatprep.subr.bf16.mxu0 0
    %427 = vmatpush1.bf16.msra.mxu0 0
    %428 = vmatprep.subr.bf16.mxu0 0
    %429 = vmatpush1.bf16.msra.mxu0 0
    %430 = vmatprep.subr.bf16.mxu0 0
    %431 = vmatpush1.bf16.msra.mxu0 0
    %432 = vmatprep.subr.bf16.mxu0 0
    %433 = vmatpush1.bf16.msra.mxu0 0
    %434 = vmatprep.subr.bf16.mxu0 0
    %435 = vmatpush1.bf16.msra.mxu0 0
    %436 = vmatprep.subr.bf16.mxu0 0
    %437 = vmatpush1.bf16.msra.mxu0 0
    %438 = vmatprep.subr.bf16.mxu0 0
    %439 = vmatpush1.bf16.msra.mxu0 0
    %440 = vmatprep.mubr.bf16.mxu0 0
    %441 = vmatmul.mubr.bf16.gmra.mrb[0].mxu0 %v336
    %v442 = vpop.f32.mrb[0].mxu0
    %v443 = vadd.f32 %v358, %v442
    %v444 = vpop.f32.mrb[0].mxu0
    %v445 = vpop.f32.mrb[0].mxu0
    %v446 = vadd.f32 %v358, %v445
    %v447 = vpop.f32.mrb[0].mxu0
    %448 = vdwg.mxu0
    %v449 = vtanh.pop %v443
    %v450 = vtanh.pop %v446
    %v451 = vmul.f32 %v331, %v83
    %v452 = vmul.f32 %v333, %v84
    %v453 = vsub.f32 1.0, %v331
    %v454 = vsub.f32 1.0, %v333
    %v455 = vmul.f32 %v453, %v449
    %v456 = vmul.f32 %v454, %v450
    %v457 = vadd.f32 %v451, %v455
    %v458 = vadd.f32 %v452, %v456
    %459 = vst [vmem:[#allocation10] sm:$0xff] %v457
    %460 = vst [vmem:[#allocation10 + $0x8] sm:$0xff] %v458
    // Predicated region
    $region46: #{tpu_custom_call.1} parent=1 // pred_check
      _
    $region47: #{tpu_custom_call.1} parent=1 // pred_check_branch
      %462 = sbr.rel (0) target = $region49
    $region48: #{tpu_custom_call.1} parent=1 // pred_region
      %s464 = ssub.s32 256, 256
      %465 = vsyncadd [#allocation4], %s464
      %s466 = sshll.u32 [#allocation10], 4
      %s467 = int_to_ptr.vmem [resolvable:$true] %s466
      %472 = dma.vmem_to_hbm [thread:$0]  %s467, 256, %s7, [#allocation4], 128, 128, 8
    $region49: #{tpu_custom_call.1} parent=1 // pred_fallthru
      _
    // Predicated region
    $region50: #{tpu_custom_call.1} parent=1 // pred_check
      _
    $region51: #{tpu_custom_call.1} parent=1 // pred_check_branch
      %474 = sbr.rel (0) target = $region53
    $region52: #{tpu_custom_call.1} parent=1 // pred_region
      %475 = dma.done [#allocation4], 256
    $region53: #{tpu_custom_call.1} parent=1 // pred_fallthru
      _
    %476 = vsyncpa [#allocation3], 1
    %477 = vsyncpa [#allocation6], 1
    %478 = vsyncpa [#allocation9], 1
    %479 = vsyncpa [#allocation4], 1

</llo_original>
